<compile_context>
chip_gen: v6e
topology: v6e:2x2x1
jax: 0.10.0
libtpu: 0.0.40
codegen_flags: <defaults>
</compile_context>

<pallas_src>
import functools

import jax
import jax.numpy as jnp
from jax.experimental import pallas as pl
from jax.experimental.pallas import tpu as pltpu


def _round_up(x: int, m: int) -> int:
    return ((x + m - 1) // m) * m


def _focal_loss_kernel(x_ref, t_ref, *rest, gamma, n_valid, tn, has_weight):
    # x_ref: (TN, C) logits, t_ref: (TN, 1) int32 targets,
    # optional w_ref: (1, C) class weights,
    # num_ref / den_ref: (1, 1, 128) lane-dense per-tile partial sums.
    if has_weight:
        w_ref, num_ref, den_ref = rest
    else:
        (num_ref,) = rest

    x = x_ref[...].astype(jnp.float32)                        # (TN, C)
    t = t_ref[...]                                            # (TN, 1)

    # Softmax statistics over the class (lane) axis.  Only `ez` is a full-tile
    # temporary; everything downstream is (TN, 1).
    m = jnp.max(x, axis=1, keepdims=True)                     # (TN, 1)
    ez = jnp.exp(x - m)                                       # (TN, C)
    se = jnp.sum(ez, axis=1, keepdims=True)                   # (TN, 1)

    # One-hot gather of the target-column logit (no gather/scatter op).
    col = jax.lax.broadcasted_iota(jnp.int32, x.shape, 1)     # (TN, C)
    onehot = col == t                                         # (TN, C)
    x_t = jnp.sum(jnp.where(onehot, x, 0.0), axis=1,
                  keepdims=True)                              # (TN, 1) = x[i, t_i]

    logpt_t = (x_t - m) - jnp.log(se)                         # (TN, 1) log p_t
    pt_t = jnp.exp(logpt_t)                                   # (TN, 1)
    omp = jnp.maximum(1.0 - pt_t, 0.0)                        # clamp fp noise
    if gamma == 2:
        mod = omp * omp                                       # pure VPU
    elif isinstance(gamma, int):
        mod = jax.lax.integer_pow(omp, gamma)
    else:
        mod = omp ** gamma                                    # EUP on (TN,1) only
    focal_t = mod * logpt_t                                   # (TN, 1)

    # Validity mask for the (possibly partial) last row tile.  Applied as a
    # select-to-0 so garbage rows (incl. NaN/Inf) never reach the reduction.
    row = (jax.lax.broadcasted_iota(jnp.int32, (x.shape[0], 1), 0)
           + pl.program_id(0) * tn)                           # (TN, 1)
    valid = row < n_valid

    if has_weight:
        w = w_ref[...]                                        # (1, C)
        w_t = jnp.sum(jnp.where(onehot, w, 0.0), axis=1,
                      keepdims=True)                          # (TN, 1) = w[t_i]
        num = jnp.sum(jnp.where(valid, -w_t * focal_t, 0.0))
        den = jnp.sum(jnp.where(valid, w_t, 0.0))
        num_ref[...] = jnp.full(num_ref.shape, num, num_ref.dtype)
        den_ref[...] = jnp.full(den_ref.shape, den, den_ref.dtype)
    else:
        num = jnp.sum(jnp.where(valid, -focal_t, 0.0))
        num_ref[...] = jnp.full(num_ref.shape, num, num_ref.dtype)


def focal_loss(logits, targets, gamma=2, weight=None):
    """Focal loss. logits: (N, C) f32/bf16, targets: (N,) int. Returns scalar."""
    N, C = logits.shape
    has_weight = weight is not None

    # --- Row-tile sizing -----------------------------------------------------
    # Target ~2 MiB of f32 per input block (sweet spot for HBM roofline on all
    # generations), multiple of 8 rows, never larger than the (rounded) data,
    # and G >= 2 when N allows it so v7x megacore shards the parallel axis.
    c_lanes = _round_up(C, 128)              # VMEM lane footprint per row (f32)
    TN = max(8, (2 * 1024 * 1024) // (c_lanes * 4))
    TN = min(TN, 2048)
    TN = min(TN, _round_up(N, 8))
    if N > 8:
        TN = min(TN, max(8, _round_up(pl.cdiv(N, 2), 8)))
    TN = _round_up(TN, 8)
    G = pl.cdiv(N, TN)

    t = targets.reshape(N, 1).astype(jnp.int32)

    kernel = functools.partial(_focal_loss_kernel, gamma=gamma, n_valid=N,
                               tn=TN, has_weight=has_weight)

    in_specs = [
        pl.BlockSpec((TN, C), lambda i: (i, 0)),       # full class extent, no pad
        pl.BlockSpec((TN, 1), lambda i: (i, 0)),
    ]
    operands = [logits, t]
    out_shape = [jax.ShapeDtypeStruct((G, 1, 128), jnp.float32)]
    out_specs = [pl.BlockSpec((1, 1, 128), lambda i: (i, 0, 0))]

    if has_weight:
        w = jnp.asarray(weight).reshape(1, C).astype(jnp.float32)
        in_specs.append(pl.BlockSpec((1, C), lambda i: (0, 0)))
        operands.append(w)
        out_shape.append(jax.ShapeDtypeStruct((G, 1, 128), jnp.float32))
        out_specs.append(pl.BlockSpec((1, 1, 128), lambda i: (i, 0, 0)))

    cost = pl.CostEstimate(
        flops=8 * N * C,
        transcendentals=N * C,
        bytes_accessed=N * C * jnp.dtype(logits.dtype).itemsize + N * 4,
    )

    outs = pl.pallas_call(
        kernel,
        out_shape=tuple(out_shape),
        grid_spec=pl.GridSpec(
            grid=(G,),
            in_specs=in_specs,
            out_specs=tuple(out_specs),
        ),
        compiler_params=pltpu.CompilerParams(
            dimension_semantics=("parallel",),
            vmem_limit_bytes=32 * 1024 * 1024,   # safe on v5e/v6e/v7x
        ),
        cost_estimate=cost,
    )(*operands)

    # Tiny O(G) finalize in plain JAX (weighted mean, as nll_loss does).
    if has_weight:
        num_out, den_out = outs
        return jnp.sum(num_out[:, 0, 0]) / jnp.sum(den_out[:, 0, 0])
    (num_out,) = outs
    return jnp.sum(num_out[:, 0, 0]) / N      # den == N analytically when weight=None


def focal_loss_ref(logits, targets, gamma=2, weight=None):
    """Pure-JAX reference mirroring the PyTorch FocalLoss.forward."""
    logpt = jax.nn.log_softmax(logits.astype(jnp.float32), axis=1)
    pt = jnp.exp(logpt)
    focal = ((1.0 - pt) ** gamma) * logpt
    n = logits.shape[0]
    picked = focal[jnp.arange(n), targets]
    if weight is None:
        return -jnp.mean(picked)
    w = weight[targets]
    return -(jnp.sum(w * picked) / jnp.sum(w))


if __name__ == "__main__":
    key = jax.random.PRNGKey(0)
    k_x, k_t, k_w, k_x2, k_t2 = jax.random.split(key, 5)

    # Case 1: N divisible by the tile, unweighted (default module config).
    N1, C = 16, 10
    logits1 = jax.random.normal(k_x, (N1, C), dtype=jnp.float32) * 2.0
    targets1 = jax.random.randint(k_t, (N1,), 0, C)
    loss1 = jax.block_until_ready(focal_loss(logits1, targets1, gamma=2))
    ref1 = focal_loss_ref(logits1, targets1, gamma=2)
    assert loss1.shape == (), loss1.shape
    assert jnp.allclose(loss1, ref1, atol=1e-5, rtol=1e-4), (loss1, ref1)

    # Case 2: ragged N (partial last row-tile) with per-class weights.
    N2 = 6
    logits2 = jax.random.normal(k_x2, (N2, C), dtype=jnp.float32) * 2.0
    targets2 = jax.random.randint(k_t2, (N2,), 0, C)
    w = jax.random.uniform(k_w, (C,), dtype=jnp.float32) + 0.5
    loss2 = jax.block_until_ready(focal_loss(logits2, targets2, gamma=2, weight=w))
    ref2 = focal_loss_ref(logits2, targets2, gamma=2, weight=w)
    assert jnp.allclose(loss2, ref2, atol=1e-5, rtol=1e-4), (loss2, ref2)

    print("KERNEL_OK")
</pallas_src>

<mosaic_0001>
module attributes {stable_mosaic.version = 11 : i64} {
  func.func @_focal_loss_kernel(%arg0: i32, %arg1: memref<8x10xf32, #tpu.memory_space<vmem>>, %arg2: memref<8x1xi32, #tpu.memory_space<vmem>>, %arg3: memref<1x1x128xf32, #tpu.memory_space<vmem>>) attributes {dimension_semantics = [#tpu.dimension_semantics<parallel>], iteration_bounds = array<i64: 2>, scalar_prefetch = 0 : i64, scratch_operands = 0 : i64, tpu.core_type = #tpu.core_type<tc>, window_params = [{transform_indices = @transform_0, window_bounds = array<i64: 8, 10>}, {transform_indices = @transform_1, window_bounds = array<i64: 8, 1>}, {transform_indices = @transform_2, window_bounds = array<i64: 1, 1, 128>}]} {
    %c0 = arith.constant 0 : index
    %c0_0 = arith.constant 0 : index
    %0 = vector.load %arg1[%c0, %c0_0] : memref<8x10xf32, #tpu.memory_space<vmem>>, vector<8x10xf32>
    %c0_1 = arith.constant 0 : index
    %c0_2 = arith.constant 0 : index
    %1 = vector.load %arg2[%c0_1, %c0_2] : memref<8x1xi32, #tpu.memory_space<vmem>>, vector<8x1xi32>
    %cst = arith.constant dense<0xFF800000> : vector<8xf32>
    %2 = vector.multi_reduction <maximumf>, %0, %cst [1] : vector<8x10xf32> to vector<8xf32>
    %3 = vector.shape_cast %2 : vector<8xf32> to vector<8x1xf32>
    %4 = vector.broadcast %3 : vector<8x1xf32> to vector<8x10xf32>
    %5 = arith.subf %0, %4 : vector<8x10xf32>
    %6 = math.exp %5 : vector<8x10xf32>
    %cst_3 = arith.constant dense<0.000000e+00> : vector<8xf32>
    %7 = vector.multi_reduction <add>, %6, %cst_3 [1] : vector<8x10xf32> to vector<8xf32>
    %8 = vector.shape_cast %7 : vector<8xf32> to vector<8x1xf32>
    %9 = tpu.iota {dimensions = array<i32: 1>} : vector<8x10xi32>
    %10 = vector.broadcast %1 : vector<8x1xi32> to vector<8x10xi32>
    %11 = arith.cmpi eq, %9, %10 : vector<8x10xi32>
    %cst_4 = arith.constant 0.000000e+00 : f32
    %12 = vector.broadcast %cst_4 : f32 to vector<8x10xf32>
    %13 = arith.select %11, %0, %12 : vector<8x10xi1>, vector<8x10xf32>
    %cst_5 = arith.constant dense<0.000000e+00> : vector<8xf32>
    %14 = vector.multi_reduction <add>, %13, %cst_5 [1] : vector<8x10xf32> to vector<8xf32>
    %15 = vector.shape_cast %14 : vector<8xf32> to vector<8x1xf32>
    %16 = arith.subf %15, %3 : vector<8x1xf32>
    %17 = math.log %8 : vector<8x1xf32>
    %18 = arith.subf %16, %17 : vector<8x1xf32>
    %19 = math.exp %18 : vector<8x1xf32>
    %cst_6 = arith.constant 1.000000e+00 : f32
    %20 = vector.broadcast %cst_6 : f32 to vector<8x1xf32>
    %21 = arith.subf %20, %19 : vector<8x1xf32>
    %cst_7 = arith.constant 0.000000e+00 : f32
    %22 = vector.broadcast %cst_7 : f32 to vector<8x1xf32>
    %23 = arith.maximumf %21, %22 : vector<8x1xf32>
    %24 = arith.mulf %23, %23 : vector<8x1xf32>
    %25 = arith.mulf %24, %18 : vector<8x1xf32>
    %26 = tpu.iota {dimensions = array<i32: 0>} : vector<8x1xi32>
    %c8_i32 = arith.constant 8 : i32
    %27 = arith.muli %arg0, %c8_i32 : i32
    %28 = vector.broadcast %27 : i32 to vector<8x1xi32>
    %29 = arith.addi %26, %28 : vector<8x1xi32>
    %c16_i32 = arith.constant 16 : i32
    %30 = vector.broadcast %c16_i32 : i32 to vector<8x1xi32>
    %31 = arith.cmpi slt, %29, %30 : vector<8x1xi32>
    %cst_8 = arith.constant 0.000000e+00 : f32
    %32 = vector.broadcast %cst_8 : f32 to vector<8x1xf32>
    %33 = arith.subf %32, %25 : vector<8x1xf32>
    %cst_9 = arith.constant 0.000000e+00 : f32
    %34 = vector.broadcast %cst_9 : f32 to vector<8x1xf32>
    %35 = arith.select %31, %33, %34 : vector<8x1xi1>, vector<8x1xf32>
    %36 = vector.shape_cast %35 : vector<8x1xf32> to vector<1x8x1xf32>
    %cst_10 = arith.constant dense<0.000000e+00> : vector<1xf32>
    %37 = vector.multi_reduction <add>, %36, %cst_10 [1, 2] : vector<1x8x1xf32> to vector<1xf32>
    %38 = vector.shape_cast %37 : vector<1xf32> to vector<1x1x1xf32>
    %39 = vector.extract %38[0, 0, 0] : f32 from vector<1x1x1xf32>
    %40 = vector.broadcast %39 : f32 to vector<1x1x128xf32>
    %c0_11 = arith.constant 0 : index
    %c0_12 = arith.constant 0 : index
    %c0_13 = arith.constant 0 : index
    %41 = vector.load %arg3[%c0_11, %c0_12, %c0_13] : memref<1x1x128xf32, #tpu.memory_space<vmem>>, vector<1x1x128xf32>
    tpu.vector_store %arg3[%c0_11, %c0_12, %c0_13], %40 {strides = array<i32>} : memref<1x1x128xf32, #tpu.memory_space<vmem>>, vector<1x1x128xf32>,
    return
  }
  func.func @transform_0(%arg0: i32) -> (i32, i32) {
    %c0_i32 = arith.constant 0 : i32
    %c0_i32_0 = arith.constant 0 : i32
    return %arg0, %c0_i32 : i32, i32
  }
  func.func @transform_1(%arg0: i32) -> (i32, i32) {
    %c0_i32 = arith.constant 0 : i32
    %c0_i32_0 = arith.constant 0 : i32
    return %arg0, %c0_i32 : i32, i32
  }
  func.func @transform_2(%arg0: i32) -> (i32, i32, i32) {
    %c0_i32 = arith.constant 0 : i32
    %c0_i32_0 = arith.constant 0 : i32
    %c0_i32_1 = arith.constant 0 : i32
    return %arg0, %c0_i32, %c0_i32_0 : i32, i32, i32
  }
}

</mosaic_0001>

<llo_original>
// kernel: tpu_custom_call.1
$region0: #{tpu_custom_call.1}
  #allocation0 [shape = 'u32[]', space=smem, size = 0x4, offset = 0x4, fixed_abs, tag = 'smem constant byte address 0x4 - core index']
  #allocation1 [shape = 'u32[144,128]{1,0:T(1,128)}', space=vmem, size = 0x12000, scoped, tag = 'internal scratch']
  %s0 = inlined_call_operand.vmem [shape: f32[16,10], index: 0, kind: input, shape index: {}]
  %s1 = inlined_call_operand.vmem [shape: s32[16,1], index: 1, kind: input, shape index: {}]
  %s2 = inlined_call_operand.hbm [shape: f32[2,1,128], index: 2, kind: output, shape index: {}]
  %s3 = sld [smem:[#allocation0]]
  $region41: #{tpu_custom_call.1} parent=0
    _
  %s5 = ssub.s32 1, %s3
  %s6 = scalar_select 0, %s5, %s3
  $region1: #{tpu_custom_call.1} parent=0
    #allocation2 [shape = 'u8[1024]{0}', space=vmem, size = 0x400, scoped, tag = 'output window, operand 0']
    #allocation3 [shape = 's32[2]{0}', space=sflag, size = 0x8, scoped, tag = 'scoped memory for tpu_custom_call.1']
    %7 = vsyncpa [#allocation3], 0
    %s8 = scalar_lea.sflag [#allocation3], 1
    %9 = vsyncpa %s8, 0
    loop: start=0, step=1, limit=4
    $region2: #{tpu_custom_call.1} parent=1 // loop_pre_header
      _
    $region3: #{tpu_custom_call.1} parent=1 // loop_header
      %s11 = sphi 0, %s15
      %p12 = scmp.ge.s32.totalorder %s11, 4
      %s21 = sphi 0, %s23
      %s24 = sphi 0, %s21
      %s25 = sphi 0, %s24
      %s41 = sphi 0, %s25
      %s47 = sphi 0, %s49
      %s50 = sphi 0, %s47
      %s51 = sphi 0, %s50
      %s67 = sphi 0, %s51
      %s73 = sphi 0, %s75
      %s76 = sphi 0, %s73
      %s77 = sphi 0, %s76
      %s93 = sphi 0, %s77
    $region4: #{tpu_custom_call.1} parent=1 // loop_header_branch
      %14 = sbr.rel (%p12) target = $region8
    $region5: #{tpu_custom_call.1} parent=1 // loop_body
      %s16 = ssub.s32 %s11, 1
      %s17 = ssub.s32 %s11, 2
      %s18 = sadd.s32 %s11, 1
      %s19 = ssub.s32 %s11, %s18
      %p20 = scmp.eq.s32.totalorder %s19, 0
      %s22 = sadd.s32 %s21, 1
      %s23 = scalar_select %p20, %s21, %s22
      %p26 = pneg %p20
      %p27 = scmp.eq.s32.totalorder %s11, 1
      %p28 = por %p26, %p27
      %p29 = scmp.ne.s32.totalorder %s21, %s24
      %p30 = scmp.eq.s32.totalorder %s11, 0
      %p31 = por %p29, %p30
      %p32 = scmp.ne.s32.totalorder %s21, %s24
      %p33 = scmp.eq.s32.totalorder %s16, 1
      %p34 = por %p32, %p33
      %p35 = scmp.ne.s32.totalorder %s24, %s25
      %p36 = scmp.eq.s32.totalorder %s16, 0
      %p37 = por %p35, %p36
      %p38 = scmp.ne.s32.totalorder %s24, %s25
      %p39 = scmp.eq.s32.totalorder %s17, 1
      %p40 = por %p38, %p39
      %p42 = scmp.ne.s32.totalorder %s25, %s41
      %p43 = scmp.eq.s32.totalorder %s17, 0
      %p44 = por %p42, %p43
      %s45 = ssub.s32 %s11, %s18
      %p46 = scmp.eq.s32.totalorder %s45, 0
      %s48 = sadd.s32 %s47, 1
      %s49 = scalar_select %p46, %s47, %s48
      %p52 = pneg %p46
      %p53 = scmp.eq.s32.totalorder %s11, 1
      %p54 = por %p52, %p53
      %p55 = scmp.ne.s32.totalorder %s47, %s50
      %p56 = scmp.eq.s32.totalorder %s11, 0
      %p57 = por %p55, %p56
      %p58 = scmp.ne.s32.totalorder %s47, %s50
      %p59 = scmp.eq.s32.totalorder %s16, 1
      %p60 = por %p58, %p59
      %p61 = scmp.ne.s32.totalorder %s50, %s51
      %p62 = scmp.eq.s32.totalorder %s16, 0
      %p63 = por %p61, %p62
      %p64 = scmp.ne.s32.totalorder %s50, %s51
      %p65 = scmp.eq.s32.totalorder %s17, 1
      %p66 = por %p64, %p65
      %p68 = scmp.ne.s32.totalorder %s51, %s67
      %p69 = scmp.eq.s32.totalorder %s17, 0
      %p70 = por %p68, %p69
      %s71 = ssub.s32 %s11, %s18
      %p72 = scmp.eq.s32.totalorder %s71, 0
      %s74 = sadd.s32 %s73, 1
      %s75 = scalar_select %p72, %s73, %s74
      %p78 = pneg %p72
      %p79 = scmp.eq.s32.totalorder %s11, 1
      %p80 = por %p78, %p79
      %p81 = scmp.ne.s32.totalorder %s73, %s76
      %p82 = scmp.eq.s32.totalorder %s11, 0
      %p83 = por %p81, %p82
      %p84 = scmp.ne.s32.totalorder %s73, %s76
      %p85 = scmp.eq.s32.totalorder %s16, 1
      %p86 = por %p84, %p85
      %p87 = scmp.ne.s32.totalorder %s76, %s77
      %p88 = scmp.eq.s32.totalorder %s16, 0
      %p89 = por %p87, %p88
      %p90 = scmp.ne.s32.totalorder %s76, %s77
      %p91 = scmp.eq.s32.totalorder %s17, 1
      %p92 = por %p90, %p91
      %p94 = scmp.ne.s32.totalorder %s77, %s93
      %p95 = scmp.eq.s32.totalorder %s17, 0
      %p96 = por %p94, %p95
      %p97 = scmp.le.s32.totalorder 1, %s11
      %p98 = scmp.lt.s32.totalorder %s11, 3
      %p99 = pnand %p97, %p98
      %p100 = pneg %p99
      // Predicated region
      $region9: #{tpu_custom_call.1} parent=5 // pred_check
        _
      $region10: #{tpu_custom_call.1} parent=5 // pred_check_branch
        %102 = sbr.rel (%p99) target = $region12
      $region11: #{tpu_custom_call.1} parent=5 // pred_region
        %s103 = ssub.s32 %s11, 1
      $region12: #{tpu_custom_call.1} parent=5 // pred_fallthru
        _
      %p104 = scmp.lt.s32.totalorder %s11, 2
      // Predicated region
      $region13: #{tpu_custom_call.1} parent=5 // pred_check
        %p105 = pneg %p104
      $region14: #{tpu_custom_call.1} parent=5 // pred_check_branch
        %107 = sbr.rel (%p105) target = $region16
      $region15: #{tpu_custom_call.1} parent=5 // pred_region
        // Predicated region
        $region17: #{tpu_custom_call.1} parent=15 // pred_check
          %p108 = pneg %p31
        $region18: #{tpu_custom_call.1} parent=15 // pred_check_branch
          %110 = sbr.rel (%p108) target = $region20
        $region19: #{tpu_custom_call.1} parent=15 // pred_region
          %p111 = scmp.lt.s32.totalorder %s11, 1
          %s112 = scalar_select %p111, %s11, 1
          %s113 = smul.addr %s112, 8
          %s114 = scalar_lea.vmem %s0, %s113
        $region20: #{tpu_custom_call.1} parent=15 // pred_fallthru
          _
        // Predicated region
        $region21: #{tpu_custom_call.1} parent=15 // pred_check
          %p115 = pneg %p57
        $region22: #{tpu_custom_call.1} parent=15 // pred_check_branch
          %117 = sbr.rel (%p115) target = $region24
        $region23: #{tpu_custom_call.1} parent=15 // pred_region
          %p118 = scmp.lt.s32.totalorder %s11, 1
          %s119 = scalar_select %p118, %s11, 1
          %s120 = smul.addr %s119, 8
          %s121 = scalar_lea.vmem %s1, %s120
        $region24: #{tpu_custom_call.1} parent=15 // pred_fallthru
          _
      $region16: #{tpu_custom_call.1} parent=5 // pred_fallthru
        _
      %p122 = scmp.le.s32.totalorder 1, %s11
      %p123 = scmp.lt.s32.totalorder %s11, 3
      %p124 = pnand %p122, %p123
      %p125 = pneg %p124
      // Predicated region
      $region25: #{tpu_custom_call.1} parent=5 // pred_check
        _
      $region26: #{tpu_custom_call.1} parent=5 // pred_check_branch
        %127 = sbr.rel (%p124) target = $region28
      $region27: #{tpu_custom_call.1} parent=5 // pred_region
        %s128 = ssub.s32 %s11, 1
        %p129 = scmp.lt.s32.totalorder %s16, 1
        %s130 = scalar_select %p129, %s16, 1
        %s131 = smul.addr %s130, 8
        %s132 = scalar_lea.vmem %s0, %s131
        %p133 = pneg %p37
        %p134 = pneg %p34
        %p135 = scmp.lt.s32.totalorder %s16, 1
        %s136 = scalar_select %p135, %s16, 1
        %s137 = smul.addr %s136, 8
        %s138 = scalar_lea.vmem %s1, %s137
        %p139 = pneg %p63
        %p140 = pneg %p60
        %p141 = pneg %p89
        %p142 = pneg %p86
        %s143 = sand.u32 %s76, 1
        %s144 = scalar_lea.sflag [#allocation3], %s143
        %s145 = sand.u32 %s76, 1
        %s146 = scalar_lea.vmem [#allocation2], %s145
        %p147 = scmp.lt.s32.totalorder %s16, 1
        %s148 = scalar_select %p147, %s16, 1
        %s149 = smul.addr %s148, 8
        %s150 = scalar_lea.vmem %s0, %s149
        %p151 = scmp.lt.s32.totalorder %s16, 1
        %s152 = scalar_select %p151, %s16, 1
        %s153 = smul.addr %s152, 8
        %s154 = scalar_lea.vmem %s1, %s153
        %v155 = vld [vmem:[%s150] sm:$0xff]
        %v156 = vld [vmem:[%s154] sm:$0xff]
        %vm157 = vcmask 80896
        %v158 = vsel %vm157, %v155, -inf
        %159 = vmax.xlane.f32.xlu0 %v158
        %v160 = vpop.xlane.xlu0 %159
        %v161 = vsub.f32 %v155, %v160
        %v162 = vmul.f32 %v161, 1.442695
        %v163 = vpow.pop %v162
        %v164 = vsel %vm157, %v163, 0.0
        %165 = vadd.xlane.f32.xlu0 %v164
        %v166 = vpop.xlane.xlu0 %165
        %v167 = vlaneseq
        %v168 = vand.u32 %v167, 127
        %169 = vset.pattern.permute.xlu0 0
        %170 = vperm.xlu0 %169, %v156
        %v171 = vpop.permute.xlu0 %170
        %vm172 = vcmp.eq.s32.totalorder %v168, %v171
        %v173 = vsel %vm172, %v155, 0.0
        %v174 = vsel %vm157, %v173, 0.0
        %175 = vadd.xlane.f32.xlu0 %v174
        %v176 = vpop.xlane.xlu0 %175
        %v177 = vsub.f32 %v176, %v160
        %v178 = vlog2.pop %v166
        %v179 = vmul.f32 %v178, 0.6931472
        %v180 = vsub.f32 %v177, %v179
        %v181 = vmul.f32 %v180, 1.442695
        %v182 = vpow.pop %v181
        %v183 = vsub.f32 1.0, %v182
        %v184 = vmax.f32 %v183, 0.0
        %v185 = vmul.f32 %v184, %v184
        %v186 = vmul.f32 %v185, %v180
        %v187 = vlaneseq
        %v188 = vshrl.u32 %v187, 7
        %s189 = smul.u32 %s16, 8
        %v190 = vstv %s189
        %v191 = vadd.s32 %v188, %v190
        %vm192 = vcmp.lt.s32.totalorder %v191, 16
        %v193 = vsub.f32 0.0, %v186
        %v194 = vsel %vm192, %v193, 0.0
        %vm195 = vcmask 7168
        %v196 = vsel %vm195, %v194, 0.0
        %197 = vadd.xlane.f32.xlu0 %v196
        %v198 = vpop.xlane.xlu0 %197
        %v199 = vrot.slane %v198, 4
        %v200 = vadd.f32 %v198, %v199
        %v201 = vrot.slane %v200, 2
        %v202 = vadd.f32 %v200, %v201
        %v203 = vrot.slane %v202, 1
        %v204 = vadd.f32 %v202, %v203
        %s205 = vtos %v204
        %v206 = vstv %s205
        %207 = vst [vmem:[%s146] sm:$0x1] %v206
        %s208 = sand.u32 %s76, 1
        %s209 = scalar_lea.sflag [#allocation3], %s208
        %s210 = sand.u32 %s76, 1
        %s211 = scalar_lea.vmem [#allocation2], %s210
        // Predicated region
        $region29: #{tpu_custom_call.1} parent=27 // pred_check
          %p212 = pneg %p86
        $region30: #{tpu_custom_call.1} parent=27 // pred_check_branch
          %214 = sbr.rel (%p212) target = $region32
        $region31: #{tpu_custom_call.1} parent=27 // pred_region
          %s216 = ssub.s32 16, 16
          %217 = vsyncadd %s209, %s216
          %s218 = smul.addr %s16, 16
          %s219 = scalar_lea.hbm %s2, %s218
          %s221 = sshll.u32 %s211, 4
          %s222 = int_to_ptr.vmem [resolvable:$true] %s221
          %224 = dma.vmem_to_hbm [thread:$0]  %s222, 16, %s219, %s209
        $region32: #{tpu_custom_call.1} parent=27 // pred_fallthru
          _
      $region28: #{tpu_custom_call.1} parent=5 // pred_fallthru
        _
      %p225 = scmp.le.s32.totalorder 2, %s11
      // Predicated region
      $region33: #{tpu_custom_call.1} parent=5 // pred_check
        %p226 = pneg %p225
      $region34: #{tpu_custom_call.1} parent=5 // pred_check_branch
        %228 = sbr.rel (%p226) target = $region36
      $region35: #{tpu_custom_call.1} parent=5 // pred_region
        %s229 = ssub.s32 %s11, 2
        // Predicated region
        $region37: #{tpu_custom_call.1} parent=35 // pred_check
          %p230 = pneg %p92
        $region38: #{tpu_custom_call.1} parent=35 // pred_check_branch
          %232 = sbr.rel (%p230) target = $region40
        $region39: #{tpu_custom_call.1} parent=35 // pred_region
          %s233 = sand.u32 %s77, 1
          %s234 = scalar_lea.sflag [#allocation3], %s233
          %s235 = sand.u32 %s77, 1
          %s236 = scalar_lea.vmem [#allocation2], %s235
          %237 = dma.done %s234, 16
        $region40: #{tpu_custom_call.1} parent=35 // pred_fallthru
          _
      $region36: #{tpu_custom_call.1} parent=5 // pred_fallthru
        _
    $region6: #{tpu_custom_call.1} parent=1 // loop_footer
      %s15 = sadd.s32 1, %s11
    $region7: #{tpu_custom_call.1} parent=1 // loop_footer_branch
      %10 = sbr.rel target = $region3
    $region8: #{tpu_custom_call.1} parent=1 // loop_exit
      _
    %238 = vsyncpa [#allocation3], 1
    %s239 = scalar_lea.sflag [#allocation3], 1
    %240 = vsyncpa %s239, 1

</llo_original>
